<compile_context>
chip_gen: v6e
topology: v6e:2x2x1
jax: 0.10.0
libtpu: 0.0.40
codegen_flags: <defaults>
</compile_context>

<pallas_src>
import functools

import jax
import jax.numpy as jnp
from jax.experimental import pallas as pl
from jax.experimental.pallas import tpu as pltpu


def _round_up(x, m):
    return ((x + m - 1) // m) * m


# ---------- Pass 1: tiled bf16 matmul + streamed per-channel sum / sum(y^2) -----
def _matmul_stats_kernel(x_ref, w_ref, y_ref, stats_ref, acc_sum_ref, acc_sq_ref):
    i = pl.program_id(1)            # reduction ("arbitrary") axis within a split

    @pl.when(i == 0)
    def _():
        acc_sum_ref[...] = jnp.zeros_like(acc_sum_ref)
        acc_sq_ref[...] = jnp.zeros_like(acc_sq_ref)

    # MXU: bf16 (TILE_N, in_p) @ bf16 (in_p, out_p) -> f32 (TILE_N, out_p).
    y = jnp.dot(x_ref[...], w_ref[...], preferred_element_type=jnp.float32)
    y_ref[...] = y.astype(y_ref.dtype)          # bf16 intermediate (halved traffic)

    # Per-sublane-group partial sums: (TILE_N, out_p) -> (TILE_N//8, 8, out_p),
    # summed over the leading axis. Pure VALU adds of whole vregs; the (8, out_p)
    # scratch updates are full unmasked stores. Padded zero rows contribute 0.
    g = y.shape[0] // 8
    y3 = y.reshape(g, 8, y.shape[1])
    acc_sum_ref[...] += jnp.sum(y3, axis=0)
    acc_sq_ref[...] += jnp.sum(y3 * y3, axis=0)

    # Flush once per split into this split's (1, 2, out_p) stats block.
    @pl.when(i == pl.num_programs(1) - 1)
    def _():
        stats_ref[:, 0:1, :] = jnp.sum(acc_sum_ref[...], axis=0, keepdims=True)[None]
        stats_ref[:, 1:2, :] = jnp.sum(acc_sq_ref[...], axis=0, keepdims=True)[None]


# ---------- Pass 2: global BN (folded scale/shift) + LeakyReLU -------------------
def _normalize_kernel(stats_ref, gamma_ref, beta_ref, y_ref, o_ref, *,
                      inv_n, eps, neg_slope):
    tot = jnp.sum(stats_ref[...], axis=0)                   # (2, out_p) over splits
    mean = tot[0:1, :] * inv_n
    # NOTE: single-pass E[y^2]-E[y]^2 in f32; acceptable for BN-scale activations.
    var = tot[1:2, :] * inv_n - mean * mean
    scale = gamma_ref[...] * jax.lax.rsqrt(var + eps)        # rsqrt -> EUP slot
    shift = beta_ref[...] - mean * scale
    y = y_ref[...].astype(jnp.float32) * scale + shift       # f32 VPU math
    o_ref[...] = jnp.where(y >= 0.0, y, neg_slope * y).astype(o_ref.dtype)


def unary_block(x, w_t, gamma, beta, *, tile_n=None, eps=1e-5, neg_slope=0.1,
                mxu_dtype=jnp.bfloat16, y_dtype=jnp.bfloat16):
    """x: (N, in_dim), w_t: (in_dim, out_dim), gamma/beta: (out_dim,) or (1, out_dim)."""
    n, in_dim = x.shape
    out_dim = w_t.shape[1]
    out_dtype = x.dtype

    # --- generation-aware sizing ------------------------------------------------
    try:
        vmem_cap = int(getattr(pltpu.get_tpu_info(), "vmem_capacity_bytes", 0)) \
            or (64 << 20)
    except Exception:
        vmem_cap = 64 << 20
    if tile_n is None:
        tile_n = 2048 if vmem_cap >= (96 << 20) else 1024    # v5e/v6e vs v7x

    # Lane-dense channel padding; point axis padded to the tile (multiple of 8).
    in_p = _round_up(in_dim, 128)
    out_p = _round_up(out_dim, 128)
    tile_n = max(8, _round_up(min(int(tile_n), max(n, 8)), 8))

    tiles_total = -(-n // tile_n)
    n_splits = 2 if tiles_total >= 2 else 1      # give v7x's 2nd TC work in pass 1
    tiles_per_split = -(-tiles_total // n_splits)
    n_p = n_splits * tiles_per_split * tile_n
    total_tiles = n_p // tile_n

    xp = jnp.pad(x.astype(mxu_dtype), ((0, n_p - n), (0, in_p - in_dim)))
    wp = jnp.pad(w_t.astype(mxu_dtype), ((0, in_p - in_dim), (0, out_p - out_dim)))
    gp = jnp.pad(jnp.asarray(gamma, jnp.float32).reshape(1, -1),
                 ((0, 0), (0, out_p - out_dim)))
    bp = jnp.pad(jnp.asarray(beta, jnp.float32).reshape(1, -1),
                 ((0, 0), (0, out_p - out_dim)))

    mxu_b = jnp.dtype(mxu_dtype).itemsize
    y_b = jnp.dtype(y_dtype).itemsize
    out_b = jnp.dtype(out_dtype).itemsize
    pass1_bytes = (2 * tile_n * in_p * mxu_b        # x, double-buffered
                   + 2 * tile_n * out_p * y_b       # y out, double-buffered
                   + 2 * in_p * out_p * mxu_b       # resident W
                   + 32 * out_p * 4)                # stats / scratch
    pass2_bytes = (2 * tile_n * out_p * y_b
                   + 2 * tile_n * out_p * out_b
                   + 16 * out_p * 4)
    vmem_limit = int(min(max(2 * max(pass1_bytes, pass2_bytes), 8 << 20),
                         (vmem_cap * 3) // 4))

    # --- Pass 1: y = x @ W (bf16 MXU) + per-split channel sum / sum(y^2) ---------
    y_full, stats = pl.pallas_call(
        _matmul_stats_kernel,
        out_shape=(
            jax.ShapeDtypeStruct((n_p, out_p), y_dtype),
            jax.ShapeDtypeStruct((n_splits, 2, out_p), jnp.float32),
        ),
        grid_spec=pltpu.PrefetchScalarGridSpec(
            num_scalar_prefetch=0,
            grid=(n_splits, tiles_per_split),
            in_specs=[
                pl.BlockSpec((tile_n, in_p),
                             lambda c, i: (c * tiles_per_split + i, 0)),
                pl.BlockSpec((in_p, out_p), lambda c, i: (0, 0)),   # W resident
            ],
            out_specs=[
                pl.BlockSpec((tile_n, out_p),
                             lambda c, i: (c * tiles_per_split + i, 0)),
                pl.BlockSpec((1, 2, out_p), lambda c, i: (c, 0, 0)),  # per-split stats
            ],
            scratch_shapes=[
                pltpu.VMEM((8, out_p), jnp.float32),   # sum(y) partials
                pltpu.VMEM((8, out_p), jnp.float32),   # sum(y*y) partials
            ],
        ),
        compiler_params=pltpu.CompilerParams(
            dimension_semantics=("parallel", "arbitrary"),
            vmem_limit_bytes=vmem_limit,
        ),
    )(xp, wp)

    # --- Pass 2: normalize + affine + LeakyReLU, independent N tiles -------------
    kernel2 = functools.partial(
        _normalize_kernel,
        inv_n=1.0 / float(n), eps=float(eps), neg_slope=float(neg_slope))
    out = pl.pallas_call(
        kernel2,
        out_shape=jax.ShapeDtypeStruct((n_p, out_p), out_dtype),
        grid_spec=pltpu.PrefetchScalarGridSpec(
            num_scalar_prefetch=0,
            grid=(total_tiles,),
            in_specs=[
                pl.BlockSpec((n_splits, 2, out_p), lambda i: (0, 0, 0)),
                pl.BlockSpec((1, out_p), lambda i: (0, 0)),
                pl.BlockSpec((1, out_p), lambda i: (0, 0)),
                pl.BlockSpec((tile_n, out_p), lambda i: (i, 0)),
            ],
            out_specs=pl.BlockSpec((tile_n, out_p), lambda i: (i, 0)),
        ),
        compiler_params=pltpu.CompilerParams(
            dimension_semantics=("parallel",),
            vmem_limit_bytes=vmem_limit,
        ),
    )(stats, gp, bp, y_full)

    return out[:n, :out_dim]


def unary_block_ref(x, w_t, gamma, beta):
    """Pure-JAX f32 reference (PyTorch forward semantics, training-mode BN stats)."""
    y = x @ w_t
    mean = jnp.mean(y, axis=0, keepdims=True)
    var = jnp.mean((y - mean) ** 2, axis=0, keepdims=True)
    y = (y - mean) / jnp.sqrt(var + 1e-5)
    y = y * jnp.asarray(gamma).reshape(1, -1) + jnp.asarray(beta).reshape(1, -1)
    return jnp.where(y >= 0.0, y, 0.1 * y)


if __name__ == "__main__":
    # Small shapes consistent with the module: N points, per-point feature vecs.
    N, in_dim, out_dim = 64, 32, 48

    key = jax.random.PRNGKey(0)
    kx, kw, kg, kb = jax.random.split(key, 4)

    x = jax.random.normal(kx, (N, in_dim), dtype=jnp.float32)

    # nn.Linear kaiming-uniform-style init (deterministic, synthetic).
    bound = 1.0 / (in_dim ** 0.5)
    w = jax.random.uniform(kw, (out_dim, in_dim), jnp.float32, -bound, bound)
    w_t = w.T  # (in_dim, out_dim)

    # BatchNorm1d affine params (perturbed so the affine path is exercised).
    gamma = 1.0 + 0.1 * jax.random.normal(kg, (1, out_dim), jnp.float32)
    beta = 0.1 * jax.random.normal(kb, (1, out_dim), jnp.float32)

    out = jax.block_until_ready(unary_block(x, w_t, gamma, beta))

    ref = unary_block_ref(x, w_t, gamma, beta)
    assert out.shape == (N, out_dim)
    assert out.dtype == x.dtype
    # bf16 MXU inputs + bf16 intermediate y -> looser tolerance than pure f32.
    assert jnp.allclose(out, ref, atol=5e-2, rtol=5e-2), \
        float(jnp.max(jnp.abs(out - ref)))

    print("KERNEL_OK")
</pallas_src>

<mosaic_0001>
module attributes {stable_mosaic.version = 11 : i64} {
  func.func @_matmul_stats_kernel(%arg0: i32, %arg1: i32, %arg2: memref<64x128xbf16, #tpu.memory_space<vmem>>, %arg3: memref<128x128xbf16, #tpu.memory_space<vmem>>, %arg4: memref<64x128xbf16, #tpu.memory_space<vmem>>, %arg5: memref<1x2x128xf32, #tpu.memory_space<vmem>>, %arg6: memref<8x128xf32, #tpu.memory_space<vmem>>, %arg7: memref<8x128xf32, #tpu.memory_space<vmem>>) attributes {dimension_semantics = [#tpu.dimension_semantics<parallel>, #tpu.dimension_semantics<arbitrary>], iteration_bounds = array<i64: 1, 1>, scalar_prefetch = 0 : i64, scratch_operands = 2 : i64, tpu.core_type = #tpu.core_type<tc>, window_params = [{transform_indices = @transform_0, window_bounds = array<i64: 64, 128>}, {pipeline_mode = #tpu.pipeline_mode<synchronous>, transform_indices = @transform_1, window_bounds = array<i64: 128, 128>}, {transform_indices = @transform_2, window_bounds = array<i64: 64, 128>}, {transform_indices = @transform_3, window_bounds = array<i64: 1, 2, 128>}]} {
    %c0_i32 = arith.constant 0 : i32
    %0 = arith.cmpi eq, %arg1, %c0_i32 : i32
    %1 = arith.extui %0 : i1 to i32
    %c0_i32_0 = arith.constant 0 : i32
    %2 = arith.cmpi ne, %1, %c0_i32_0 : i32
    scf.if %2 {
      %cst_18 = arith.constant 0.000000e+00 : f32
      %21 = vector.broadcast %cst_18 : f32 to vector<8x128xf32>
      %c0_19 = arith.constant 0 : index
      %c0_20 = arith.constant 0 : index
      %22 = vector.load %arg6[%c0_19, %c0_20] : memref<8x128xf32, #tpu.memory_space<vmem>>, vector<8x128xf32>
      tpu.vector_store %arg6[%c0_19, %c0_20], %21 {strides = array<i32>} : memref<8x128xf32, #tpu.memory_space<vmem>>, vector<8x128xf32>,
      %cst_21 = arith.constant 0.000000e+00 : f32
      %23 = vector.broadcast %cst_21 : f32 to vector<8x128xf32>
      %c0_22 = arith.constant 0 : index
      %c0_23 = arith.constant 0 : index
      %24 = vector.load %arg7[%c0_22, %c0_23] : memref<8x128xf32, #tpu.memory_space<vmem>>, vector<8x128xf32>
      tpu.vector_store %arg7[%c0_22, %c0_23], %23 {strides = array<i32>} : memref<8x128xf32, #tpu.memory_space<vmem>>, vector<8x128xf32>,
    } else {
    }
    %c0 = arith.constant 0 : index
    %c0_1 = arith.constant 0 : index
    %3 = vector.load %arg2[%c0, %c0_1] : memref<64x128xbf16, #tpu.memory_space<vmem>>, vector<64x128xbf16>
    %c0_2 = arith.constant 0 : index
    %c0_3 = arith.constant 0 : index
    %4 = vector.load %arg3[%c0_2, %c0_3] : memref<128x128xbf16, #tpu.memory_space<vmem>>, vector<128x128xbf16>
    %cst = arith.constant dense<0.000000e+00> : vector<64x128xf32>
    %5 = tpu.matmul %3, %4, %cst {dimension_numbers = #tpu.dot_dimension_numbers<[1], [0], [0], [1], [0, 0, 1, 1], [], []>} : vector<64x128xbf16>, vector<128x128xbf16>, vector<64x128xf32> -> vector<64x128xf32>
    %6 = arith.truncf %5 : vector<64x128xf32> to vector<64x128xbf16>
    %c0_4 = arith.constant 0 : index
    %c0_5 = arith.constant 0 : index
    %7 = vector.load %arg4[%c0_4, %c0_5] : memref<64x128xbf16, #tpu.memory_space<vmem>>, vector<64x128xbf16>
    tpu.vector_store %arg4[%c0_4, %c0_5], %6 {strides = array<i32>} : memref<64x128xbf16, #tpu.memory_space<vmem>>, vector<64x128xbf16>,
    %8 = vector.shape_cast %5 : vector<64x128xf32> to vector<8x8x128xf32>
    %c0_6 = arith.constant 0 : index
    %c0_7 = arith.constant 0 : index
    %9 = vector.load %arg6[%c0_6, %c0_7] : memref<8x128xf32, #tpu.memory_space<vmem>>, vector<8x128xf32>
    %cst_8 = arith.constant dense<0.000000e+00> : vector<8x128xf32>
    %10 = vector.multi_reduction <add>, %8, %cst_8 [0] : vector<8x8x128xf32> to vector<8x128xf32>
    %11 = arith.addf %9, %10 : vector<8x128xf32>
    %c0_9 = arith.constant 0 : index
    %c0_10 = arith.constant 0 : index
    %12 = vector.load %arg6[%c0_9, %c0_10] : memref<8x128xf32, #tpu.memory_space<vmem>>, vector<8x128xf32>
    tpu.vector_store %arg6[%c0_9, %c0_10], %11 {strides = array<i32>} : memref<8x128xf32, #tpu.memory_space<vmem>>, vector<8x128xf32>,
    %c0_11 = arith.constant 0 : index
    %c0_12 = arith.constant 0 : index
    %13 = vector.load %arg7[%c0_11, %c0_12] : memref<8x128xf32, #tpu.memory_space<vmem>>, vector<8x128xf32>
    %14 = arith.mulf %8, %8 : vector<8x8x128xf32>
    %cst_13 = arith.constant dense<0.000000e+00> : vector<8x128xf32>
    %15 = vector.multi_reduction <add>, %14, %cst_13 [0] : vector<8x8x128xf32> to vector<8x128xf32>
    %16 = arith.addf %13, %15 : vector<8x128xf32>
    %c0_14 = arith.constant 0 : index
    %c0_15 = arith.constant 0 : index
    %17 = vector.load %arg7[%c0_14, %c0_15] : memref<8x128xf32, #tpu.memory_space<vmem>>, vector<8x128xf32>
    tpu.vector_store %arg7[%c0_14, %c0_15], %16 {strides = array<i32>} : memref<8x128xf32, #tpu.memory_space<vmem>>, vector<8x128xf32>,
    %c0_i32_16 = arith.constant 0 : i32
    %18 = arith.cmpi eq, %arg1, %c0_i32_16 : i32
    %19 = arith.extui %18 : i1 to i32
    %c0_i32_17 = arith.constant 0 : i32
    %20 = arith.cmpi ne, %19, %c0_i32_17 : i32
    scf.if %20 {
      %c0_18 = arith.constant 0 : index
      %c0_19 = arith.constant 0 : index
      %21 = vector.load %arg6[%c0_18, %c0_19] : memref<8x128xf32, #tpu.memory_space<vmem>>, vector<8x128xf32>
      %cst_20 = arith.constant dense<0.000000e+00> : vector<128xf32>
      %22 = vector.multi_reduction <add>, %21, %cst_20 [0] : vector<8x128xf32> to vector<128xf32>
      %23 = vector.shape_cast %22 : vector<128xf32> to vector<1x128xf32>
      %24 = vector.shape_cast %23 : vector<1x128xf32> to vector<1x1x128xf32>
      %c0_21 = arith.constant 0 : index
      %c0_22 = arith.constant 0 : index
      %c0_23 = arith.constant 0 : index
      %25 = vector.load %arg5[%c0_21, %c0_22, %c0_23] : memref<1x2x128xf32, #tpu.memory_space<vmem>>, vector<1x1x128xf32>
      tpu.vector_store %arg5[%c0_21, %c0_22, %c0_23], %24 {strides = array<i32>} : memref<1x2x128xf32, #tpu.memory_space<vmem>>, vector<1x1x128xf32>,
      %c0_24 = arith.constant 0 : index
      %c0_25 = arith.constant 0 : index
      %26 = vector.load %arg7[%c0_24, %c0_25] : memref<8x128xf32, #tpu.memory_space<vmem>>, vector<8x128xf32>
      %cst_26 = arith.constant dense<0.000000e+00> : vector<128xf32>
      %27 = vector.multi_reduction <add>, %26, %cst_26 [0] : vector<8x128xf32> to vector<128xf32>
      %28 = vector.shape_cast %27 : vector<128xf32> to vector<1x128xf32>
      %29 = vector.shape_cast %28 : vector<1x128xf32> to vector<1x1x128xf32>
      %c0_27 = arith.constant 0 : index
      %c1 = arith.constant 1 : index
      %c0_28 = arith.constant 0 : index
      %30 = vector.load %arg5[%c0_27, %c1, %c0_28] : memref<1x2x128xf32, #tpu.memory_space<vmem>>, vector<1x1x128xf32>
      tpu.vector_store %arg5[%c0_27, %c1, %c0_28], %29 {strides = array<i32>} : memref<1x2x128xf32, #tpu.memory_space<vmem>>, vector<1x1x128xf32>,
    } else {
    }
    return
  }
  func.func @transform_0(%arg0: i32, %arg1: i32) -> (i32, i32) {
    %c1_i32 = arith.constant 1 : i32
    %0 = arith.muli %arg0, %c1_i32 : i32
    %1 = arith.addi %0, %arg1 : i32
    %c0_i32 = arith.constant 0 : i32
    %c0_i32_0 = arith.constant 0 : i32
    return %1, %c0_i32 : i32, i32
  }
  func.func @transform_1(%arg0: i32, %arg1: i32) -> (i32, i32) {
    %c0_i32 = arith.constant 0 : i32
    %c0_i32_0 = arith.constant 0 : i32
    %c0_i32_1 = arith.constant 0 : i32
    return %c0_i32, %c0_i32_0 : i32, i32
  }
  func.func @transform_2(%arg0: i32, %arg1: i32) -> (i32, i32) {
    %c1_i32 = arith.constant 1 : i32
    %0 = arith.muli %arg0, %c1_i32 : i32
    %1 = arith.addi %0, %arg1 : i32
    %c0_i32 = arith.constant 0 : i32
    %c0_i32_0 = arith.constant 0 : i32
    return %1, %c0_i32 : i32, i32
  }
  func.func @transform_3(%arg0: i32, %arg1: i32) -> (i32, i32, i32) {
    %c0_i32 = arith.constant 0 : i32
    %c0_i32_0 = arith.constant 0 : i32
    %c0_i32_1 = arith.constant 0 : i32
    return %arg0, %c0_i32, %c0_i32_0 : i32, i32, i32
  }
}

</mosaic_0001>

<llo_original>
// kernel: tpu_custom_call.1
$region0: #{tpu_custom_call.1}
  #allocation0 [shape = 'u32[]', space=smem, size = 0x4, offset = 0x4, fixed_abs, tag = 'smem constant byte address 0x4 - core index']
  #allocation1 [shape = 'u32[144,128]{1,0:T(1,128)}', space=vmem, size = 0x12000, scoped, tag = 'internal scratch']
  #allocation2 [shape = 'f32[8,128]{1,0:T(8,128)}', space=vmem, size = 0x1000, scoped, tag = 'scratch operand']
  #allocation3 [shape = 'f32[8,128]{1,0:T(8,128)}', space=vmem, size = 0x1000, scoped, tag = 'scratch operand']
  %s0 = inlined_call_operand.hbm [shape: bf16[64,128], index: 0, kind: input, shape index: {}]
  %s1 = inlined_call_operand.hbm [shape: bf16[128,128], index: 1, kind: input, shape index: {}]
  %s2 = inlined_call_operand.hbm [shape: bf16[64,128], index: 2, kind: output, shape index: {0}]
  %s3 = inlined_call_operand.hbm [shape: f32[1,2,128], index: 3, kind: output, shape index: {1}]
  %4 = xla_tuple %s2, %s3
  %s5 = sld [smem:[#allocation0]]
  $region42: #{tpu_custom_call.1} parent=0
    _
  %s7 = ssub.s32 1, %s5
  %s8 = scalar_select 0, %s7, %s5
  $region1: #{tpu_custom_call.1} parent=0
    #allocation4 [shape = 'u8[16384]{0}', space=vmem, size = 0x4000, scoped, tag = 'input window, operand 0, single buffered']
    #allocation5 [shape = 's32[1]{0}', space=sflag, size = 0x4, scoped, tag = 'scoped memory for tpu_custom_call.1']
    #allocation6 [shape = 's32[1]{0}', space=sflag, size = 0x4, scoped, tag = 'scoped memory for tpu_custom_call.1']
    #allocation7 [shape = 'u8[32768]{0}', space=vmem, size = 0x8000, scoped, tag = 'input window, operand 1, single buffered']
    #allocation8 [shape = 's32[1]{0}', space=sflag, size = 0x4, scoped, tag = 'scoped memory for tpu_custom_call.1']
    #allocation9 [shape = 'u8[16384]{0}', space=vmem, size = 0x4000, scoped, tag = 'output window, operand 0, single buffered']
    #allocation10 [shape = 'u8[1024]{0}', space=vmem, size = 0x400, scoped, tag = 'output window, operand 1, single buffered']
    #allocation11 [shape = 's32[1]{0}', space=sflag, size = 0x4, scoped, tag = 'scoped memory for tpu_custom_call.1']
    %9 = vsyncpa [#allocation5], 0
    %10 = vsyncpa [#allocation8], 0
    %11 = vsyncpa [#allocation6], 0
    %12 = vsyncpa [#allocation11], 0
    // Predicated region
    $region2: #{tpu_custom_call.1} parent=1 // pred_check
      _
    $region3: #{tpu_custom_call.1} parent=1 // pred_check_branch
      %14 = sbr.rel (0) target = $region5
    $region4: #{tpu_custom_call.1} parent=1 // pred_region
      %s15 = sadd.s32 0, 0
      %s16 = smul.u32 8, %s15
      %s18 = ssub.s32 512, 512
      %19 = vsyncadd [#allocation5], %s18
      %s20 = smul.addr %s16, 64
      %s21 = scalar_lea.hbm %s0, %s20
      %s22 = sshll.u32 [#allocation4], 4
      %s23 = int_to_ptr.vmem [resolvable:$true] %s22
      %28 = dma.hbm_to_vmem [thread:$0]  %s21, 512, %s23, [#allocation5], 64, 64, 4
    $region5: #{tpu_custom_call.1} parent=1 // pred_fallthru
      _
    // Predicated region
    $region6: #{tpu_custom_call.1} parent=1 // pred_check
      _
    $region7: #{tpu_custom_call.1} parent=1 // pred_check_branch
      %30 = sbr.rel (0) target = $region9
    $region8: #{tpu_custom_call.1} parent=1 // pred_region
      %s32 = ssub.s32 1024, 1024
      %33 = vsyncadd [#allocation8], %s32
      %s34 = sshll.u32 [#allocation7], 4
      %s35 = int_to_ptr.vmem [resolvable:$true] %s34
      %40 = dma.hbm_to_vmem [thread:$0]  %s1, 1024, %s35, [#allocation8], 64, 64, 4
    $region9: #{tpu_custom_call.1} parent=1 // pred_fallthru
      _
    // Predicated region
    $region10: #{tpu_custom_call.1} parent=1 // pred_check
      _
    $region11: #{tpu_custom_call.1} parent=1 // pred_check_branch
      %42 = sbr.rel (0) target = $region13
    $region12: #{tpu_custom_call.1} parent=1 // pred_region
      %43 = dma.done [#allocation5], 512
    $region13: #{tpu_custom_call.1} parent=1 // pred_fallthru
      _
    // Predicated region
    $region14: #{tpu_custom_call.1} parent=1 // pred_check
      _
    $region15: #{tpu_custom_call.1} parent=1 // pred_check_branch
      %45 = sbr.rel (0) target = $region17
    $region16: #{tpu_custom_call.1} parent=1 // pred_region
      %46 = dma.done [#allocation8], 1024
    $region17: #{tpu_custom_call.1} parent=1 // pred_fallthru
      _
    %s47 = sadd.s32 0, 0
    %s48 = smul.u32 8, %s47
    %s49 = sadd.s32 0, 0
    %s50 = smul.u32 8, %s49
    %p52 = scmp.eq.s32.totalorder 0, 0
    // Predicated region
    $region18: #{tpu_custom_call.1} parent=1 // pred_check
      %p53 = pneg %p52
    $region19: #{tpu_custom_call.1} parent=1 // pred_check_branch
      %55 = sbr.rel (%p53) target = $region21
    $region20: #{tpu_custom_call.1} parent=1 // pred_region
      %56 = vst [vmem:[#allocation2] sm:$0xff] 0.0
      %57 = vst [vmem:[#allocation3] sm:$0xff] 0.0
    $region21: #{tpu_custom_call.1} parent=1 // pred_fallthru
      _
    %v58 = vld [vmem:[#allocation4] sm:$0xf]
    %v59 = vld [vmem:[#allocation4 + $0x4] sm:$0xf]
    %v60 = vld [vmem:[#allocation4 + $0x8] sm:$0xf]
    %v61 = vld [vmem:[#allocation4 + $0xc] sm:$0xf]
    %v62 = vld [vmem:[#allocation4 + $0x10] sm:$0xf]
    %v63 = vld [vmem:[#allocation4 + $0x14] sm:$0xf]
    %v64 = vld [vmem:[#allocation4 + $0x18] sm:$0xf]
    %v65 = vld [vmem:[#allocation4 + $0x1c] sm:$0xf]
    %v66 = vld [vmem:[#allocation7] sm:$0xf]
    %v67 = vld [vmem:[#allocation7 + $0x4] sm:$0xf]
    %v68 = vld [vmem:[#allocation7 + $0x8] sm:$0xf]
    %v69 = vld [vmem:[#allocation7 + $0xc] sm:$0xf]
    %v70 = vld [vmem:[#allocation7 + $0x10] sm:$0xf]
    %v71 = vld [vmem:[#allocation7 + $0x14] sm:$0xf]
    %v72 = vld [vmem:[#allocation7 + $0x18] sm:$0xf]
    %v73 = vld [vmem:[#allocation7 + $0x1c] sm:$0xf]
    %v74 = vld [vmem:[#allocation7 + $0x20] sm:$0xf]
    %v75 = vld [vmem:[#allocation7 + $0x24] sm:$0xf]
    %v76 = vld [vmem:[#allocation7 + $0x28] sm:$0xf]
    %v77 = vld [vmem:[#allocation7 + $0x2c] sm:$0xf]
    %v78 = vld [vmem:[#allocation7 + $0x30] sm:$0xf]
    %v79 = vld [vmem:[#allocation7 + $0x34] sm:$0xf]
    %v80 = vld [vmem:[#allocation7 + $0x38] sm:$0xf]
    %v81 = vld [vmem:[#allocation7 + $0x3c] sm:$0xf]
    %v90 = vunpack.c.l.b16 %v58
    %v91 = vunpack.c.l.b16 %v59
    %v92 = vunpack.c.l.b16 %v60
    %v93 = vunpack.c.l.b16 %v61
    %v94 = vunpack.c.l.b16 %v62
    %v95 = vunpack.c.l.b16 %v63
    %v96 = vunpack.c.l.b16 %v64
    %v97 = vunpack.c.l.b16 %v65
    %v98 = vpack.c.b16 %v91, %v90
    %v99 = vpack.c.b16 %v93, %v92
    %v100 = vpack.c.b16 %v95, %v94
    %v101 = vpack.c.b16 %v97, %v96
    %v122 = vunpack.c.l.b16 %v66
    %v123 = vunpack.c.l.b16 %v67
    %v124 = vunpack.c.l.b16 %v68
    %v125 = vunpack.c.l.b16 %v69
    %v126 = vunpack.c.l.b16 %v70
    %v127 = vunpack.c.l.b16 %v71
    %v128 = vunpack.c.l.b16 %v72
    %v129 = vunpack.c.l.b16 %v73
    %v130 = vunpack.c.l.b16 %v74
    %v131 = vunpack.c.l.b16 %v75
    %v132 = vunpack.c.l.b16 %v76
    %v133 = vunpack.c.l.b16 %v77
    %v134 = vunpack.c.l.b16 %v78
    %v135 = vunpack.c.l.b16 %v79
    %v136 = vunpack.c.l.b16 %v80
    %v137 = vunpack.c.l.b16 %v81
    %v138 = vpack.c.b16 %v123, %v122
    %v139 = vpack.c.b16 %v125, %v124
    %v140 = vpack.c.b16 %v127, %v126
    %v141 = vpack.c.b16 %v129, %v128
    %v142 = vpack.c.b16 %v131, %v130
    %v143 = vpack.c.b16 %v133, %v132
    %v144 = vpack.c.b16 %v135, %v134
    %v145 = vpack.c.b16 %v137, %v136
    %154 = vmatprep.subr.bf16.mxu0 0
    %155 = vmatpush1.bf16.msra.mxu0 %v145
    %156 = vmatprep.subr.bf16.mxu0 0
    %157 = vmatpush1.bf16.msra.mxu0 %v144
    %158 = vmatprep.subr.bf16.mxu0 0
    %159 = vmatpush1.bf16.msra.mxu0 %v143
    %160 = vmatprep.subr.bf16.mxu0 0
    %161 = vmatpush1.bf16.msra.mxu0 %v142
    %162 = vmatprep.subr.bf16.mxu0 0
    %163 = vmatpush1.bf16.msra.mxu0 %v141
    %164 = vmatprep.subr.bf16.mxu0 0
    %165 = vmatpush1.bf16.msra.mxu0 %v140
    %166 = vmatprep.subr.bf16.mxu0 0
    %167 = vmatpush1.bf16.msra.mxu0 %v139
    %168 = vmatprep.subr.bf16.mxu0 0
    %169 = vmatpush1.bf16.msra.mxu0 %v138
    %170 = vmatprep.subr.bf16.mxu0 0
    %171 = vmatpush2.bf16.msra.mxu0 0
    %172 = vmatprep.subr.bf16.mxu0 0
    %173 = vmatpush2.bf16.msra.mxu0 0
    %174 = vmatprep.subr.bf16.mxu0 0
    %175 = vmatpush2.bf16.msra.mxu0 0
    %176 = vmatprep.subr.bf16.mxu0 0
    %177 = vmatpush2.bf16.msra.mxu0 0
    %178 = vmatprep.subr.bf16.mxu0 0
    %179 = vmatpush2.bf16.msra.mxu0 0
    %180 = vmatprep.subr.bf16.mxu0 0
    %181 = vmatpush2.bf16.msra.mxu0 0
    %182 = vmatprep.subr.bf16.mxu0 0
    %183 = vmatpush2.bf16.msra.mxu0 0
    %184 = vmatprep.subr.bf16.mxu0 0
    %185 = vmatpush2.bf16.msra.mxu0 0
    %186 = vmatprep.mubr.bf16.mxu0 0
    %187 = vmatmul.mubr.bf16.gmra.mxu0 %v98
    %v188 = vpop.f32.mrf.mxu0
    %v189 = vadd.f32 0.0, %v188
    %v190 = vpop.f32.mrf.mxu0
    %v191 = vpop.f32.mrf.mxu0
    %v192 = vadd.f32 0.0, %v191
    %v193 = vpop.f32.mrf.mxu0
    %194 = vmatprep.mubr.bf16.mxu0 0
    %195 = vmatmul.mubr.bf16.gmra.mxu0 %v99
    %v196 = vpop.f32.mrf.mxu0
    %v197 = vadd.f32 0.0, %v196
    %v198 = vpop.f32.mrf.mxu0
    %v199 = vpop.f32.mrf.mxu0
    %v200 = vadd.f32 0.0, %v199
    %v201 = vpop.f32.mrf.mxu0
    %202 = vmatprep.mubr.bf16.mxu0 0
    %203 = vmatmul.mubr.bf16.gmra.mxu0 %v100
    %v204 = vpop.f32.mrf.mxu0
    %v205 = vadd.f32 0.0, %v204
    %v206 = vpop.f32.mrf.mxu0
    %v207 = vpop.f32.mrf.mxu0
    %v208 = vadd.f32 0.0, %v207
    %v209 = vpop.f32.mrf.mxu0
    %210 = vmatprep.mubr.bf16.mxu0 0
    %211 = vmatmul.mubr.bf16.gmra.mxu0 %v101
    %v212 = vpop.f32.mrf.mxu0
    %v213 = vadd.f32 0.0, %v212
    %v214 = vpop.f32.mrf.mxu0
    %v215 = vpop.f32.mrf.mxu0
    %v216 = vadd.f32 0.0, %v215
    %v217 = vpop.f32.mrf.mxu0
    %218 = vdwg.mxu0
    %v219 = vpack.c.bf16 %v192, %v189
    %v220 = vpack.c.bf16 %v200, %v197
    %v221 = vpack.c.bf16 %v208, %v205
    %v222 = vpack.c.bf16 %v216, %v213
    %v227 = vunpack.c.l.b16 %v219
    %v228 = vunpack.c.h.b16 %v219
    %v229 = vunpack.c.l.b16 %v220
    %v230 = vunpack.c.h.b16 %v220
    %v231 = vunpack.c.l.b16 %v221
    %v232 = vunpack.c.h.b16 %v221
    %v233 = vunpack.c.l.b16 %v222
    %v234 = vunpack.c.h.b16 %v222
    %v235 = vpack.c.b16 %v227, %v227
    %v236 = vpack.c.b16 %v228, %v228
    %v237 = vpack.c.b16 %v229, %v229
    %v238 = vpack.c.b16 %v230, %v230
    %v239 = vpack.c.b16 %v231, %v231
    %v240 = vpack.c.b16 %v232, %v232
    %v241 = vpack.c.b16 %v233, %v233
    %v242 = vpack.c.b16 %v234, %v234
    %251 = vst [vmem:[#allocation9] sm:$0xf] %v235
    %252 = vst [vmem:[#allocation9 + $0x4] sm:$0xf] %v236
    %253 = vst [vmem:[#allocation9 + $0x8] sm:$0xf] %v237
    %254 = vst [vmem:[#allocation9 + $0xc] sm:$0xf] %v238
    %255 = vst [vmem:[#allocation9 + $0x10] sm:$0xf] %v239
    %256 = vst [vmem:[#allocation9 + $0x14] sm:$0xf] %v240
    %257 = vst [vmem:[#allocation9 + $0x18] sm:$0xf] %v241
    %258 = vst [vmem:[#allocation9 + $0x1c] sm:$0xf] %v242
    %v259 = vld [vmem:[#allocation2] sm:$0xff]
    %v260 = vadd.f32 %v189, %v192
    %v261 = vadd.f32 %v260, %v197
    %v262 = vadd.f32 %v261, %v200
    %v263 = vadd.f32 %v262, %v205
    %v264 = vadd.f32 %v263, %v208
    %v265 = vadd.f32 %v264, %v213
    %v266 = vadd.f32 %v265, %v216
    %v267 = vadd.f32 %v259, %v266
    %268 = vst [vmem:[#allocation2] sm:$0xff] %v267
    %v269 = vld [vmem:[#allocation3] sm:$0xff]
    %v270 = vmul.f32 %v189, %v189
    %v271 = vmul.f32 %v192, %v192
    %v272 = vmul.f32 %v197, %v197
    %v273 = vmul.f32 %v200, %v200
    %v274 = vmul.f32 %v205, %v205
    %v275 = vmul.f32 %v208, %v208
    %v276 = vmul.f32 %v213, %v213
    %v277 = vmul.f32 %v216, %v216
    %v278 = vadd.f32 %v270, %v271
    %v279 = vadd.f32 %v278, %v272
    %v280 = vadd.f32 %v279, %v273
    %v281 = vadd.f32 %v280, %v274
    %v282 = vadd.f32 %v281, %v275
    %v283 = vadd.f32 %v282, %v276
    %v284 = vadd.f32 %v283, %v277
    %v285 = vadd.f32 %v269, %v284
    %286 = vst [vmem:[#allocation3] sm:$0xff] %v285
    // Predicated region
    $region22: #{tpu_custom_call.1} parent=1 // pred_check
      %p287 = pneg %p52
    $region23: #{tpu_custom_call.1} parent=1 // pred_check_branch
      %289 = sbr.rel (%p287) target = $region25
    $region24: #{tpu_custom_call.1} parent=1 // pred_region
      %v290 = vld [vmem:[#allocation2] sm:$0xff]
      %v291 = vrot.slane %v290, 4
      %v292 = vadd.f32 %v290, %v291
      %v293 = vrot.slane %v292, 2
      %v294 = vadd.f32 %v292, %v293
      %v295 = vrot.slane %v294, 1
      %v296 = vadd.f32 %v294, %v295
      %297 = vst [vmem:[#allocation10] sm:$0x1] %v296
      %v298 = vld [vmem:[#allocation3] sm:$0xff]
      %v299 = vrot.slane %v298, 4
      %v300 = vadd.f32 %v298, %v299
      %v301 = vrot.slane %v300, 2
      %v302 = vadd.f32 %v300, %v301
      %v303 = vrot.slane %v302, 1
      %v304 = vadd.f32 %v302, %v303
      %305 = vst [vmem:[#allocation10 + $0x1] sm:$0x1] %v304
    $region25: #{tpu_custom_call.1} parent=1 // pred_fallthru
      _
    // Predicated region
    $region26: #{tpu_custom_call.1} parent=1 // pred_check
      _
    $region27: #{tpu_custom_call.1} parent=1 // pred_check_branch
      %307 = sbr.rel (0) target = $region29
    $region28: #{tpu_custom_call.1} parent=1 // pred_region
      %s308 = sadd.s32 0, 0
      %s309 = smul.u32 8, %s308
      %s311 = ssub.s32 512, 512
      %312 = vsyncadd [#allocation6], %s311
      %s313 = smul.addr %s309, 64
      %s314 = scalar_lea.hbm %s2, %s313
      %s315 = sshll.u32 [#allocation9], 4
      %s316 = int_to_ptr.vmem [resolvable:$true] %s315
      %321 = dma.vmem_to_hbm [thread:$0]  %s316, 512, %s314, [#allocation6], 64, 64, 4
    $region29: #{tpu_custom_call.1} parent=1 // pred_fallthru
      _
    // Predicated region
    $region30: #{tpu_custom_call.1} parent=1 // pred_check
      _
    $region31: #{tpu_custom_call.1} parent=1 // pred_check_branch
      %323 = sbr.rel (0) target = $region33
    $region32: #{tpu_custom_call.1} parent=1 // pred_region
      %s325 = ssub.s32 32, 32
      %326 = vsyncadd [#allocation11], %s325
      %s328 = sshll.u32 [#allocation10], 4
      %s329 = int_to_ptr.vmem [resolvable:$true] %s328
      %331 = dma.vmem_to_hbm [thread:$0]  %s329, 32, %s3, [#allocation11]
    $region33: #{tpu_custom_call.1} parent=1 // pred_fallthru
      _
    // Predicated region
    $region34: #{tpu_custom_call.1} parent=1 // pred_check
      _
    $region35: #{tpu_custom_call.1} parent=1 // pred_check_branch
      %333 = sbr.rel (0) target = $region37
    $region36: #{tpu_custom_call.1} parent=1 // pred_region
      %334 = dma.done [#allocation6], 512
    $region37: #{tpu_custom_call.1} parent=1 // pred_fallthru
      _
    // Predicated region
    $region38: #{tpu_custom_call.1} parent=1 // pred_check
      _
    $region39: #{tpu_custom_call.1} parent=1 // pred_check_branch
      %336 = sbr.rel (0) target = $region41
    $region40: #{tpu_custom_call.1} parent=1 // pred_region
      %337 = dma.done [#allocation11], 32
    $region41: #{tpu_custom_call.1} parent=1 // pred_fallthru
      _
    %338 = vsyncpa [#allocation5], 1
    %339 = vsyncpa [#allocation8], 1
    %340 = vsyncpa [#allocation6], 1
    %341 = vsyncpa [#allocation11], 1

</llo_original>
